<compile_context>
chip_gen: v6e
topology: v6e:2x2x1
jax: 0.10.0
libtpu: 0.0.40
codegen_flags: <defaults>
</compile_context>

<pallas_src>
from functools import partial

import jax
import jax.numpy as jnp
from jax.experimental import pallas as pl
from jax.experimental.pallas import tpu as pltpu


def _conv3x3_softmax_kernel(x_ref, w_ref, b_ref, nfr_ref, nlr_ref, ncf_ref, nlc_ref,
                            o_ref, *, w_img):
    """Fused 3x3 SAME conv + per-pixel softmax over channels (one image per step).

    x_ref : (Cin, H*W) f32   -- one image, pixels (h*W + w) on the lane axis
    w_ref : (Cout, 3*3*Cin) f32 -- taps flattened in (kx, ky, ci) order
    b_ref : (Cout, 1) f32
    nfr/nlr/ncf/nlc : (1, H*W) f32 -- 0.0 at rows h==0 / h==H-1, cols w==0 / w==W-1
    o_ref : (Cout, H*W) f32  -- softmax probabilities
    """
    hw = x_ref.shape[-1]
    x = x_ref[...]                                            # (Cin, hw)
    w = w_ref[...]                                            # (Cout, 27)
    k9 = w.shape[1] // 3

    # Row taps (ky = 0 / 2) via lane rolls by +/-W.  The wrap-around rows land
    # exactly on h==0 / h==H-1 where the row masks zero them (block == image).
    top = pltpu.roll(x, w_img, axis=1) * nfr_ref[...]         # source row h-1
    bot = pltpu.roll(x, hw - w_img, axis=1) * nlr_ref[...]    # source row h+1
    x9 = jnp.concatenate([top, x, bot], axis=0)               # (3*Cin, hw), (ky, ci)

    # Column taps (kx = 0 / 2) via +/-1 lane rolls of the whole stacked block;
    # masks applied once to the full (9, hw) block (XLU rolls, no extra copies).
    left = pltpu.roll(x9, 1, axis=1) * ncf_ref[...]           # source col w-1
    right = pltpu.roll(x9, hw - 1, axis=1) * nlc_ref[...]     # source col w+1

    # Three MXU dots against the per-kx weight slices, f32 accumulation.
    logits = jnp.dot(w[:, 0:k9], left, preferred_element_type=jnp.float32)
    logits = logits + jnp.dot(w[:, k9:2 * k9], x9, preferred_element_type=jnp.float32)
    logits = logits + jnp.dot(w[:, 2 * k9:3 * k9], right, preferred_element_type=jnp.float32)
    logits = logits + b_ref[...]                              # (Cout, hw) f32

    # softmax over the channel (sublane) axis; exact normalization in f32.
    m = jnp.max(logits, axis=0, keepdims=True)
    e = jnp.exp(logits - m)
    s = jnp.sum(e, axis=0, keepdims=True)
    o_ref[...] = (e * (1.0 / s)).astype(o_ref.dtype)


def size_loss_forward(x_nchw, weight, bias):
    """x: [N, 3, H, W]; weight: [C, 3, 3, 3]; bias: [C] -> softmax probs [N, C, H, W]."""
    N, Cin, H, W = x_nchw.shape
    Cout, wc, KH, KW = weight.shape
    assert wc == Cin and (KH, KW) == (3, 3)
    HW = H * W

    # Pure-metadata reshape; no transpose, no bf16 cast pass, no replication, no pad.
    x3 = x_nchw.astype(jnp.float32).reshape(N, Cin, HW)

    # weights: [Cout, Cin, ky, kx] -> [Cout, (kx, ky, ci)] so that
    # w[:, 0:9] / [9:18] / [18:27] are the kx = 0/1/2 tap groups, each (ky, ci).
    w2 = jnp.transpose(weight, (0, 3, 2, 1)).reshape(Cout, KH * KW * Cin)
    w2 = w2.astype(jnp.float32)
    b2 = bias.reshape(Cout, 1).astype(jnp.float32)

    # Boundary masks over the flattened (h, w) pixel axis (built once, tiny).
    idx = jnp.arange(HW, dtype=jnp.int32)
    col = idx % W
    row = idx // W
    nfr = (row != 0).astype(jnp.float32).reshape(1, HW)       # not first row
    nlr = (row != H - 1).astype(jnp.float32).reshape(1, HW)   # not last row
    ncf = (col != 0).astype(jnp.float32).reshape(1, HW)       # not first col
    nlc = (col != W - 1).astype(jnp.float32).reshape(1, HW)   # not last col

    kernel = partial(_conv3x3_softmax_kernel, w_img=W)
    out = pl.pallas_call(
        kernel,
        out_shape=jax.ShapeDtypeStruct((N, Cout, HW), jnp.float32),
        grid_spec=pltpu.PrefetchScalarGridSpec(
            num_scalar_prefetch=0,
            grid=(N,),
            in_specs=[
                pl.BlockSpec((None, Cin, HW), lambda n: (n, 0, 0)),      # one image
                pl.BlockSpec((Cout, KH * KW * Cin), lambda n: (0, 0)),   # weights
                pl.BlockSpec((Cout, 1), lambda n: (0, 0)),               # bias
                pl.BlockSpec((1, HW), lambda n: (0, 0)),                 # not-first-row
                pl.BlockSpec((1, HW), lambda n: (0, 0)),                 # not-last-row
                pl.BlockSpec((1, HW), lambda n: (0, 0)),                 # not-first-col
                pl.BlockSpec((1, HW), lambda n: (0, 0)),                 # not-last-col
            ],
            out_specs=pl.BlockSpec((None, Cout, HW), lambda n: (n, 0, 0)),
        ),
        compiler_params=pltpu.CompilerParams(
            dimension_semantics=("parallel",),
            vmem_limit_bytes=48 * 1024 * 1024),
    )(x3, w2, b2, nfr, nlr, ncf, nlc)

    # Only a metadata reshape remains (no full-array transpose round trip).
    return out.reshape(N, Cout, H, W)


def _reference(x_nchw, weight, bias):
    y = jax.lax.conv_general_dilated(
        x_nchw, weight, window_strides=(1, 1), padding="SAME",
        dimension_numbers=("NCHW", "OIHW", "NCHW"))
    y = y + bias.reshape(1, -1, 1, 1)
    return jax.nn.softmax(y, axis=1)


if __name__ == "__main__":
    key = jax.random.PRNGKey(0)
    k_x, k_w, k_b = jax.random.split(key, 3)

    N, Cin, H, W = 2, 3, 16, 16
    n_classes = 4

    x = jax.random.normal(k_x, (N, Cin, H, W), dtype=jnp.float32)
    weight = 0.1 * jax.random.normal(k_w, (n_classes, Cin, 3, 3), dtype=jnp.float32)
    bias = 0.1 * jax.random.normal(k_b, (n_classes,), dtype=jnp.float32)

    out = size_loss_forward(x, weight, bias)
    out = jax.block_until_ready(out)

    ref = _reference(x, weight, bias)
    assert out.shape == (N, n_classes, H, W)
    assert bool(jnp.all(jnp.isfinite(out)))
    # f32 streaming; tolerance covers MXU default-precision matmul passes.
    assert jnp.allclose(out, ref, atol=2e-2, rtol=2e-2)
    # exact f32 normalization -> channel softmax sums to 1 tightly
    assert jnp.allclose(out.sum(axis=1), jnp.ones((N, H, W)), atol=1e-3)

    print("KERNEL_OK")
</pallas_src>

<mosaic_0001>
module attributes {stable_mosaic.version = 11 : i64} {
  func.func @_conv3x3_softmax_kernel(%arg0: i32, %arg1: memref<1x3x256xf32, #tpu.memory_space<vmem>>, %arg2: memref<4x27xf32, #tpu.memory_space<vmem>>, %arg3: memref<4x1xf32, #tpu.memory_space<vmem>>, %arg4: memref<1x256xf32, #tpu.memory_space<vmem>>, %arg5: memref<1x256xf32, #tpu.memory_space<vmem>>, %arg6: memref<1x256xf32, #tpu.memory_space<vmem>>, %arg7: memref<1x256xf32, #tpu.memory_space<vmem>>, %arg8: memref<1x4x256xf32, #tpu.memory_space<vmem>>) attributes {dimension_semantics = [#tpu.dimension_semantics<parallel>], iteration_bounds = array<i64: 2>, scalar_prefetch = 0 : i64, scratch_operands = 0 : i64, tpu.core_type = #tpu.core_type<tc>, window_params = [{transform_indices = @transform_0, window_bounds = array<i64: 1, 3, 256>}, {pipeline_mode = #tpu.pipeline_mode<synchronous>, transform_indices = @transform_1, window_bounds = array<i64: 4, 27>}, {pipeline_mode = #tpu.pipeline_mode<synchronous>, transform_indices = @transform_2, window_bounds = array<i64: 4, 1>}, {pipeline_mode = #tpu.pipeline_mode<synchronous>, transform_indices = @transform_3, window_bounds = array<i64: 1, 256>}, {pipeline_mode = #tpu.pipeline_mode<synchronous>, transform_indices = @transform_4, window_bounds = array<i64: 1, 256>}, {pipeline_mode = #tpu.pipeline_mode<synchronous>, transform_indices = @transform_5, window_bounds = array<i64: 1, 256>}, {pipeline_mode = #tpu.pipeline_mode<synchronous>, transform_indices = @transform_6, window_bounds = array<i64: 1, 256>}, {transform_indices = @transform_7, window_bounds = array<i64: 1, 4, 256>}]} {
    %c0 = arith.constant 0 : index
    %c0_0 = arith.constant 0 : index
    %c0_1 = arith.constant 0 : index
    %0 = vector.load %arg1[%c0, %c0_0, %c0_1] : memref<1x3x256xf32, #tpu.memory_space<vmem>>, vector<1x3x256xf32>
    %1 = vector.shape_cast %0 : vector<1x3x256xf32> to vector<3x256xf32>
    %c0_2 = arith.constant 0 : index
    %c0_3 = arith.constant 0 : index
    %2 = vector.load %arg2[%c0_2, %c0_3] : memref<4x27xf32, #tpu.memory_space<vmem>>, vector<4x27xf32>
    %c16_i32 = arith.constant 16 : i32
    %3 = tpu.dynamic_rotate %1 by %c16_i32 dim 1 : vector<3x256xf32>, i32 -> vector<3x256xf32>
    %c0_4 = arith.constant 0 : index
    %c0_5 = arith.constant 0 : index
    %4 = vector.load %arg4[%c0_4, %c0_5] : memref<1x256xf32, #tpu.memory_space<vmem>>, vector<1x256xf32>
    %5 = vector.broadcast %4 : vector<1x256xf32> to vector<3x256xf32>
    %6 = arith.mulf %3, %5 : vector<3x256xf32>
    %c240_i32 = arith.constant 240 : i32
    %7 = tpu.dynamic_rotate %1 by %c240_i32 dim 1 : vector<3x256xf32>, i32 -> vector<3x256xf32>
    %c0_6 = arith.constant 0 : index
    %c0_7 = arith.constant 0 : index
    %8 = vector.load %arg5[%c0_6, %c0_7] : memref<1x256xf32, #tpu.memory_space<vmem>>, vector<1x256xf32>
    %9 = vector.broadcast %8 : vector<1x256xf32> to vector<3x256xf32>
    %10 = arith.mulf %7, %9 : vector<3x256xf32>
    %11 = tpu.concatenate %6, %1, %10 in 0 : vector<3x256xf32>, vector<3x256xf32>, vector<3x256xf32> -> vector<9x256xf32>
    %c1_i32 = arith.constant 1 : i32
    %12 = tpu.dynamic_rotate %11 by %c1_i32 dim 1 : vector<9x256xf32>, i32 -> vector<9x256xf32>
    %c0_8 = arith.constant 0 : index
    %c0_9 = arith.constant 0 : index
    %13 = vector.load %arg6[%c0_8, %c0_9] : memref<1x256xf32, #tpu.memory_space<vmem>>, vector<1x256xf32>
    %14 = vector.broadcast %13 : vector<1x256xf32> to vector<9x256xf32>
    %15 = arith.mulf %12, %14 : vector<9x256xf32>
    %c255_i32 = arith.constant 255 : i32
    %16 = tpu.dynamic_rotate %11 by %c255_i32 dim 1 : vector<9x256xf32>, i32 -> vector<9x256xf32>
    %c0_10 = arith.constant 0 : index
    %c0_11 = arith.constant 0 : index
    %17 = vector.load %arg7[%c0_10, %c0_11] : memref<1x256xf32, #tpu.memory_space<vmem>>, vector<1x256xf32>
    %18 = vector.broadcast %17 : vector<1x256xf32> to vector<9x256xf32>
    %19 = arith.mulf %16, %18 : vector<9x256xf32>
    %20 = vector.extract_strided_slice %2 {offsets = [0, 0], sizes = [4, 9], strides = [1, 1]} : vector<4x27xf32> to vector<4x9xf32>
    %cst = arith.constant dense<0.000000e+00> : vector<4x256xf32>
    %21 = tpu.matmul %20, %15, %cst {dimension_numbers = #tpu.dot_dimension_numbers<[1], [0], [0], [1], [0, 0, 1, 1], [], []>} : vector<4x9xf32>, vector<9x256xf32>, vector<4x256xf32> -> vector<4x256xf32>
    %22 = vector.extract_strided_slice %2 {offsets = [0, 9], sizes = [4, 9], strides = [1, 1]} : vector<4x27xf32> to vector<4x9xf32>
    %cst_12 = arith.constant dense<0.000000e+00> : vector<4x256xf32>
    %23 = tpu.matmul %22, %11, %cst_12 {dimension_numbers = #tpu.dot_dimension_numbers<[1], [0], [0], [1], [0, 0, 1, 1], [], []>} : vector<4x9xf32>, vector<9x256xf32>, vector<4x256xf32> -> vector<4x256xf32>
    %24 = arith.addf %21, %23 : vector<4x256xf32>
    %25 = vector.extract_strided_slice %2 {offsets = [0, 18], sizes = [4, 9], strides = [1, 1]} : vector<4x27xf32> to vector<4x9xf32>
    %cst_13 = arith.constant dense<0.000000e+00> : vector<4x256xf32>
    %26 = tpu.matmul %25, %19, %cst_13 {dimension_numbers = #tpu.dot_dimension_numbers<[1], [0], [0], [1], [0, 0, 1, 1], [], []>} : vector<4x9xf32>, vector<9x256xf32>, vector<4x256xf32> -> vector<4x256xf32>
    %27 = arith.addf %24, %26 : vector<4x256xf32>
    %c0_14 = arith.constant 0 : index
    %c0_15 = arith.constant 0 : index
    %28 = vector.load %arg3[%c0_14, %c0_15] : memref<4x1xf32, #tpu.memory_space<vmem>>, vector<4x1xf32>
    %29 = vector.broadcast %28 : vector<4x1xf32> to vector<4x256xf32>
    %30 = arith.addf %27, %29 : vector<4x256xf32>
    %cst_16 = arith.constant dense<0xFF800000> : vector<256xf32>
    %31 = vector.multi_reduction <maximumf>, %30, %cst_16 [0] : vector<4x256xf32> to vector<256xf32>
    %32 = vector.shape_cast %31 : vector<256xf32> to vector<1x256xf32>
    %33 = vector.broadcast %32 : vector<1x256xf32> to vector<4x256xf32>
    %34 = arith.subf %30, %33 : vector<4x256xf32>
    %35 = math.exp %34 : vector<4x256xf32>
    %cst_17 = arith.constant dense<0.000000e+00> : vector<256xf32>
    %36 = vector.multi_reduction <add>, %35, %cst_17 [0] : vector<4x256xf32> to vector<256xf32>
    %37 = vector.shape_cast %36 : vector<256xf32> to vector<1x256xf32>
    %cst_18 = arith.constant 1.000000e+00 : f32
    %38 = vector.broadcast %cst_18 : f32 to vector<1x256xf32>
    %39 = arith.divf %38, %37 : vector<1x256xf32>
    %40 = vector.broadcast %39 : vector<1x256xf32> to vector<4x256xf32>
    %41 = arith.mulf %35, %40 : vector<4x256xf32>
    %c0_19 = arith.constant 0 : index
    %c0_20 = arith.constant 0 : index
    %c0_21 = arith.constant 0 : index
    %42 = vector.load %arg8[%c0_19, %c0_20, %c0_21] : memref<1x4x256xf32, #tpu.memory_space<vmem>>, vector<1x4x256xf32>
    %43 = vector.shape_cast %42 : vector<1x4x256xf32> to vector<4x256xf32>
    %44 = vector.shape_cast %41 : vector<4x256xf32> to vector<1x4x256xf32>
    tpu.vector_store %arg8[%c0_19, %c0_20, %c0_21], %44 {strides = array<i32>} : memref<1x4x256xf32, #tpu.memory_space<vmem>>, vector<1x4x256xf32>,
    return
  }
  func.func @transform_0(%arg0: i32) -> (i32, i32, i32) {
    %c0_i32 = arith.constant 0 : i32
    %c0_i32_0 = arith.constant 0 : i32
    %c0_i32_1 = arith.constant 0 : i32
    return %arg0, %c0_i32, %c0_i32_0 : i32, i32, i32
  }
  func.func @transform_1(%arg0: i32) -> (i32, i32) {
    %c0_i32 = arith.constant 0 : i32
    %c0_i32_0 = arith.constant 0 : i32
    %c0_i32_1 = arith.constant 0 : i32
    return %c0_i32, %c0_i32_0 : i32, i32
  }
  func.func @transform_2(%arg0: i32) -> (i32, i32) {
    %c0_i32 = arith.constant 0 : i32
    %c0_i32_0 = arith.constant 0 : i32
    %c0_i32_1 = arith.constant 0 : i32
    return %c0_i32, %c0_i32_0 : i32, i32
  }
  func.func @transform_3(%arg0: i32) -> (i32, i32) {
    %c0_i32 = arith.constant 0 : i32
    %c0_i32_0 = arith.constant 0 : i32
    %c0_i32_1 = arith.constant 0 : i32
    return %c0_i32, %c0_i32_0 : i32, i32
  }
  func.func @transform_4(%arg0: i32) -> (i32, i32) {
    %c0_i32 = arith.constant 0 : i32
    %c0_i32_0 = arith.constant 0 : i32
    %c0_i32_1 = arith.constant 0 : i32
    return %c0_i32, %c0_i32_0 : i32, i32
  }
  func.func @transform_5(%arg0: i32) -> (i32, i32) {
    %c0_i32 = arith.constant 0 : i32
    %c0_i32_0 = arith.constant 0 : i32
    %c0_i32_1 = arith.constant 0 : i32
    return %c0_i32, %c0_i32_0 : i32, i32
  }
  func.func @transform_6(%arg0: i32) -> (i32, i32) {
    %c0_i32 = arith.constant 0 : i32
    %c0_i32_0 = arith.constant 0 : i32
    %c0_i32_1 = arith.constant 0 : i32
    return %c0_i32, %c0_i32_0 : i32, i32
  }
  func.func @transform_7(%arg0: i32) -> (i32, i32, i32) {
    %c0_i32 = arith.constant 0 : i32
    %c0_i32_0 = arith.constant 0 : i32
    %c0_i32_1 = arith.constant 0 : i32
    return %arg0, %c0_i32, %c0_i32_0 : i32, i32, i32
  }
}

</mosaic_0001>

<llo_original>
// kernel: tpu_custom_call.1
$region0: #{tpu_custom_call.1}
  #allocation0 [shape = 'u32[]', space=smem, size = 0x4, offset = 0x4, fixed_abs, tag = 'smem constant byte address 0x4 - core index']
  #allocation1 [shape = 'u32[144,128]{1,0:T(1,128)}', space=vmem, size = 0x12000, scoped, tag = 'internal scratch']
  %s0 = inlined_call_operand.vmem [shape: f32[2,3,256], index: 0, kind: input, shape index: {}]
  %s1 = inlined_call_operand.vmem [shape: f32[4,27], index: 1, kind: input, shape index: {}]
  %s2 = inlined_call_operand.vmem [shape: f32[4,1], index: 2, kind: input, shape index: {}]
  %s3 = inlined_call_operand.vmem [shape: f32[1,256], index: 3, kind: input, shape index: {}]
  %s4 = inlined_call_operand.vmem [shape: f32[1,256], index: 4, kind: input, shape index: {}]
  %s5 = inlined_call_operand.vmem [shape: f32[1,256], index: 5, kind: input, shape index: {}]
  %s6 = inlined_call_operand.vmem [shape: f32[1,256], index: 6, kind: input, shape index: {}]
  %s7 = inlined_call_operand.hbm [shape: f32[2,4,256], index: 7, kind: output, shape index: {}]
  %s8 = sld [smem:[#allocation0]]
  $region61: #{tpu_custom_call.1} parent=0
    _
  %s10 = ssub.s32 1, %s8
  %s11 = scalar_select 0, %s10, %s8
  $region1: #{tpu_custom_call.1} parent=0
    #allocation2 [shape = 'u8[8192]{0}', space=vmem, size = 0x2000, scoped, tag = 'output window, operand 0']
    #allocation3 [shape = 's32[2]{0}', space=sflag, size = 0x8, scoped, tag = 'scoped memory for tpu_custom_call.1']
    %12 = vsyncpa [#allocation3], 0
    %s13 = scalar_lea.sflag [#allocation3], 1
    %14 = vsyncpa %s13, 0
    loop: start=0, step=1, limit=4
    $region2: #{tpu_custom_call.1} parent=1 // loop_pre_header
      _
    $region3: #{tpu_custom_call.1} parent=1 // loop_header
      %s16 = sphi 0, %s20
      %p17 = scmp.ge.s32.totalorder %s16, 4
      %s26 = sphi 0, %s28
      %s29 = sphi 0, %s26
      %s30 = sphi 0, %s29
      %s46 = sphi 0, %s30
      %s50 = sphi 0, %s50
      %s52 = sphi 0, %s50
      %s53 = sphi 0, %s52
      %s67 = sphi 0, %s53
      %s71 = sphi 0, %s71
      %s73 = sphi 0, %s71
      %s74 = sphi 0, %s73
      %s88 = sphi 0, %s74
      %s92 = sphi 0, %s92
      %s94 = sphi 0, %s92
      %s95 = sphi 0, %s94
      %s109 = sphi 0, %s95
      %s113 = sphi 0, %s113
      %s115 = sphi 0, %s113
      %s116 = sphi 0, %s115
      %s130 = sphi 0, %s116
      %s134 = sphi 0, %s134
      %s136 = sphi 0, %s134
      %s137 = sphi 0, %s136
      %s151 = sphi 0, %s137
      %s155 = sphi 0, %s155
      %s157 = sphi 0, %s155
      %s158 = sphi 0, %s157
      %s172 = sphi 0, %s158
      %s178 = sphi 0, %s180
      %s181 = sphi 0, %s178
      %s182 = sphi 0, %s181
      %s198 = sphi 0, %s182
    $region4: #{tpu_custom_call.1} parent=1 // loop_header_branch
      %19 = sbr.rel (%p17) target = $region8
    $region5: #{tpu_custom_call.1} parent=1 // loop_body
      %s21 = ssub.s32 %s16, 1
      %s22 = ssub.s32 %s16, 2
      %s23 = sadd.s32 %s16, 1
      %s24 = ssub.s32 %s16, %s23
      %p25 = scmp.eq.s32.totalorder %s24, 0
      %s27 = sadd.s32 %s26, 1
      %s28 = scalar_select %p25, %s26, %s27
      %p31 = pneg %p25
      %p32 = scmp.eq.s32.totalorder %s16, 1
      %p33 = por %p31, %p32
      %p34 = scmp.ne.s32.totalorder %s26, %s29
      %p35 = scmp.eq.s32.totalorder %s16, 0
      %p36 = por %p34, %p35
      %p37 = scmp.ne.s32.totalorder %s26, %s29
      %p38 = scmp.eq.s32.totalorder %s21, 1
      %p39 = por %p37, %p38
      %p40 = scmp.ne.s32.totalorder %s29, %s30
      %p41 = scmp.eq.s32.totalorder %s21, 0
      %p42 = por %p40, %p41
      %p43 = scmp.ne.s32.totalorder %s29, %s30
      %p44 = scmp.eq.s32.totalorder %s22, 1
      %p45 = por %p43, %p44
      %p47 = scmp.ne.s32.totalorder %s30, %s46
      %p48 = scmp.eq.s32.totalorder %s22, 0
      %p49 = por %p47, %p48
      %s51 = sadd.s32 %s50, 1
      %p54 = scmp.eq.s32.totalorder %s16, 1
      %p55 = scmp.ne.s32.totalorder %s50, %s52
      %p56 = scmp.eq.s32.totalorder %s16, 0
      %p57 = por %p55, %p56
      %p58 = scmp.ne.s32.totalorder %s50, %s52
      %p59 = scmp.eq.s32.totalorder %s21, 1
      %p60 = por %p58, %p59
      %p61 = scmp.ne.s32.totalorder %s52, %s53
      %p62 = scmp.eq.s32.totalorder %s21, 0
      %p63 = por %p61, %p62
      %p64 = scmp.ne.s32.totalorder %s52, %s53
      %p65 = scmp.eq.s32.totalorder %s22, 1
      %p66 = por %p64, %p65
      %p68 = scmp.ne.s32.totalorder %s53, %s67
      %p69 = scmp.eq.s32.totalorder %s22, 0
      %p70 = por %p68, %p69
      %s72 = sadd.s32 %s71, 1
      %p75 = scmp.eq.s32.totalorder %s16, 1
      %p76 = scmp.ne.s32.totalorder %s71, %s73
      %p77 = scmp.eq.s32.totalorder %s16, 0
      %p78 = por %p76, %p77
      %p79 = scmp.ne.s32.totalorder %s71, %s73
      %p80 = scmp.eq.s32.totalorder %s21, 1
      %p81 = por %p79, %p80
      %p82 = scmp.ne.s32.totalorder %s73, %s74
      %p83 = scmp.eq.s32.totalorder %s21, 0
      %p84 = por %p82, %p83
      %p85 = scmp.ne.s32.totalorder %s73, %s74
      %p86 = scmp.eq.s32.totalorder %s22, 1
      %p87 = por %p85, %p86
      %p89 = scmp.ne.s32.totalorder %s74, %s88
      %p90 = scmp.eq.s32.totalorder %s22, 0
      %p91 = por %p89, %p90
      %s93 = sadd.s32 %s92, 1
      %p96 = scmp.eq.s32.totalorder %s16, 1
      %p97 = scmp.ne.s32.totalorder %s92, %s94
      %p98 = scmp.eq.s32.totalorder %s16, 0
      %p99 = por %p97, %p98
      %p100 = scmp.ne.s32.totalorder %s92, %s94
      %p101 = scmp.eq.s32.totalorder %s21, 1
      %p102 = por %p100, %p101
      %p103 = scmp.ne.s32.totalorder %s94, %s95
      %p104 = scmp.eq.s32.totalorder %s21, 0
      %p105 = por %p103, %p104
      %p106 = scmp.ne.s32.totalorder %s94, %s95
      %p107 = scmp.eq.s32.totalorder %s22, 1
      %p108 = por %p106, %p107
      %p110 = scmp.ne.s32.totalorder %s95, %s109
      %p111 = scmp.eq.s32.totalorder %s22, 0
      %p112 = por %p110, %p111
      %s114 = sadd.s32 %s113, 1
      %p117 = scmp.eq.s32.totalorder %s16, 1
      %p118 = scmp.ne.s32.totalorder %s113, %s115
      %p119 = scmp.eq.s32.totalorder %s16, 0
      %p120 = por %p118, %p119
      %p121 = scmp.ne.s32.totalorder %s113, %s115
      %p122 = scmp.eq.s32.totalorder %s21, 1
      %p123 = por %p121, %p122
      %p124 = scmp.ne.s32.totalorder %s115, %s116
      %p125 = scmp.eq.s32.totalorder %s21, 0
      %p126 = por %p124, %p125
      %p127 = scmp.ne.s32.totalorder %s115, %s116
      %p128 = scmp.eq.s32.totalorder %s22, 1
      %p129 = por %p127, %p128
      %p131 = scmp.ne.s32.totalorder %s116, %s130
      %p132 = scmp.eq.s32.totalorder %s22, 0
      %p133 = por %p131, %p132
      %s135 = sadd.s32 %s134, 1
      %p138 = scmp.eq.s32.totalorder %s16, 1
      %p139 = scmp.ne.s32.totalorder %s134, %s136
      %p140 = scmp.eq.s32.totalorder %s16, 0
      %p141 = por %p139, %p140
      %p142 = scmp.ne.s32.totalorder %s134, %s136
      %p143 = scmp.eq.s32.totalorder %s21, 1
      %p144 = por %p142, %p143
      %p145 = scmp.ne.s32.totalorder %s136, %s137
      %p146 = scmp.eq.s32.totalorder %s21, 0
      %p147 = por %p145, %p146
      %p148 = scmp.ne.s32.totalorder %s136, %s137
      %p149 = scmp.eq.s32.totalorder %s22, 1
      %p150 = por %p148, %p149
      %p152 = scmp.ne.s32.totalorder %s137, %s151
      %p153 = scmp.eq.s32.totalorder %s22, 0
      %p154 = por %p152, %p153
      %s156 = sadd.s32 %s155, 1
      %p159 = scmp.eq.s32.totalorder %s16, 1
      %p160 = scmp.ne.s32.totalorder %s155, %s157
      %p161 = scmp.eq.s32.totalorder %s16, 0
      %p162 = por %p160, %p161
      %p163 = scmp.ne.s32.totalorder %s155, %s157
      %p164 = scmp.eq.s32.totalorder %s21, 1
      %p165 = por %p163, %p164
      %p166 = scmp.ne.s32.totalorder %s157, %s158
      %p167 = scmp.eq.s32.totalorder %s21, 0
      %p168 = por %p166, %p167
      %p169 = scmp.ne.s32.totalorder %s157, %s158
      %p170 = scmp.eq.s32.totalorder %s22, 1
      %p171 = por %p169, %p170
      %p173 = scmp.ne.s32.totalorder %s158, %s172
      %p174 = scmp.eq.s32.totalorder %s22, 0
      %p175 = por %p173, %p174
      %s176 = ssub.s32 %s16, %s23
      %p177 = scmp.eq.s32.totalorder %s176, 0
      %s179 = sadd.s32 %s178, 1
      %s180 = scalar_select %p177, %s178, %s179
      %p183 = pneg %p177
      %p184 = scmp.eq.s32.totalorder %s16, 1
      %p185 = por %p183, %p184
      %p186 = scmp.ne.s32.totalorder %s178, %s181
      %p187 = scmp.eq.s32.totalorder %s16, 0
      %p188 = por %p186, %p187
      %p189 = scmp.ne.s32.totalorder %s178, %s181
      %p190 = scmp.eq.s32.totalorder %s21, 1
      %p191 = por %p189, %p190
      %p192 = scmp.ne.s32.totalorder %s181, %s182
      %p193 = scmp.eq.s32.totalorder %s21, 0
      %p194 = por %p192, %p193
      %p195 = scmp.ne.s32.totalorder %s181, %s182
      %p196 = scmp.eq.s32.totalorder %s22, 1
      %p197 = por %p195, %p196
      %p199 = scmp.ne.s32.totalorder %s182, %s198
      %p200 = scmp.eq.s32.totalorder %s22, 0
      %p201 = por %p199, %p200
      %p202 = scmp.le.s32.totalorder 1, %s16
      %p203 = scmp.lt.s32.totalorder %s16, 3
      %p204 = pnand %p202, %p203
      %p205 = pneg %p204
      // Predicated region
      $region9: #{tpu_custom_call.1} parent=5 // pred_check
        _
      $region10: #{tpu_custom_call.1} parent=5 // pred_check_branch
        %207 = sbr.rel (%p204) target = $region12
      $region11: #{tpu_custom_call.1} parent=5 // pred_region
        %s208 = ssub.s32 %s16, 1
        // Predicated region
        $region13: #{tpu_custom_call.1} parent=11 // pred_check
          %p209 = pneg %p63
        $region14: #{tpu_custom_call.1} parent=11 // pred_check_branch
          %211 = sbr.rel (%p209) target = $region16
        $region15: #{tpu_custom_call.1} parent=11 // pred_region
          _
        $region16: #{tpu_custom_call.1} parent=11 // pred_fallthru
          _
        // Predicated region
        $region17: #{tpu_custom_call.1} parent=11 // pred_check
          %p212 = pneg %p84
        $region18: #{tpu_custom_call.1} parent=11 // pred_check_branch
          %214 = sbr.rel (%p212) target = $region20
        $region19: #{tpu_custom_call.1} parent=11 // pred_region
          _
        $region20: #{tpu_custom_call.1} parent=11 // pred_fallthru
          _
        // Predicated region
        $region21: #{tpu_custom_call.1} parent=11 // pred_check
          %p215 = pneg %p105
        $region22: #{tpu_custom_call.1} parent=11 // pred_check_branch
          %217 = sbr.rel (%p215) target = $region24
        $region23: #{tpu_custom_call.1} parent=11 // pred_region
          _
        $region24: #{tpu_custom_call.1} parent=11 // pred_fallthru
          _
        // Predicated region
        $region25: #{tpu_custom_call.1} parent=11 // pred_check
          %p218 = pneg %p126
        $region26: #{tpu_custom_call.1} parent=11 // pred_check_branch
          %220 = sbr.rel (%p218) target = $region28
        $region27: #{tpu_custom_call.1} parent=11 // pred_region
          _
        $region28: #{tpu_custom_call.1} parent=11 // pred_fallthru
          _
        // Predicated region
        $region29: #{tpu_custom_call.1} parent=11 // pred_check
          %p221 = pneg %p147
        $region30: #{tpu_custom_call.1} parent=11 // pred_check_branch
          %223 = sbr.rel (%p221) target = $region32
        $region31: #{tpu_custom_call.1} parent=11 // pred_region
          _
        $region32: #{tpu_custom_call.1} parent=11 // pred_fallthru
          _
        // Predicated region
        $region33: #{tpu_custom_call.1} parent=11 // pred_check
          %p224 = pneg %p168
        $region34: #{tpu_custom_call.1} parent=11 // pred_check_branch
          %226 = sbr.rel (%p224) target = $region36
        $region35: #{tpu_custom_call.1} parent=11 // pred_region
          _
        $region36: #{tpu_custom_call.1} parent=11 // pred_fallthru
          _
      $region12: #{tpu_custom_call.1} parent=5 // pred_fallthru
        _
      %p227 = scmp.lt.s32.totalorder %s16, 2
      // Predicated region
      $region37: #{tpu_custom_call.1} parent=5 // pred_check
        %p228 = pneg %p227
      $region38: #{tpu_custom_call.1} parent=5 // pred_check_branch
        %230 = sbr.rel (%p228) target = $region40
      $region39: #{tpu_custom_call.1} parent=5 // pred_region
        // Predicated region
        $region41: #{tpu_custom_call.1} parent=39 // pred_check
          %p231 = pneg %p36
        $region42: #{tpu_custom_call.1} parent=39 // pred_check_branch
          %233 = sbr.rel (%p231) target = $region44
        $region43: #{tpu_custom_call.1} parent=39 // pred_region
          %p234 = scmp.lt.s32.totalorder %s16, 1
          %s235 = scalar_select %p234, %s16, 1
          %s236 = smul.addr %s235, 2
          %s237 = smul.addr %s236, 4
          %s238 = scalar_lea.vmem %s0, %s237
        $region44: #{tpu_custom_call.1} parent=39 // pred_fallthru
          _
      $region40: #{tpu_custom_call.1} parent=5 // pred_fallthru
        _
      %p239 = scmp.le.s32.totalorder 1, %s16
      %p240 = scmp.lt.s32.totalorder %s16, 3
      %p241 = pnand %p239, %p240
      %p242 = pneg %p241
      // Predicated region
      $region45: #{tpu_custom_call.1} parent=5 // pred_check
        _
      $region46: #{tpu_custom_call.1} parent=5 // pred_check_branch
        %244 = sbr.rel (%p241) target = $region48
      $region47: #{tpu_custom_call.1} parent=5 // pred_region
        %s245 = ssub.s32 %s16, 1
        %p246 = scmp.lt.s32.totalorder %s21, 1
        %s247 = scalar_select %p246, %s21, 1
        %s248 = smul.addr %s247, 2
        %s249 = smul.addr %s248, 4
        %s250 = scalar_lea.vmem %s0, %s249
        %p251 = pneg %p42
        %p252 = pneg %p39
        %p253 = pneg %p63
        %p254 = pneg %p60
        %p255 = pneg %p84
        %p256 = pneg %p81
        %p257 = pneg %p105
        %p258 = pneg %p102
        %p259 = pneg %p126
        %p260 = pneg %p123
        %p261 = pneg %p147
        %p262 = pneg %p144
        %p263 = pneg %p168
        %p264 = pneg %p165
        %p265 = pneg %p194
        %p266 = pneg %p191
        %s267 = sand.u32 %s181, 1
        %s268 = scalar_lea.sflag [#allocation3], %s267
        %s269 = sand.u32 %s181, 1
        %s270 = smul.addr %s269, 8
        %s271 = scalar_lea.vmem [#allocation2], %s270
        %p272 = scmp.lt.s32.totalorder %s21, 1
        %s273 = scalar_select %p272, %s21, 1
        %s274 = smul.addr %s273, 2
        %s275 = smul.addr %s274, 4
        %s276 = scalar_lea.vmem %s0, %s275
        %v277 = vld [vmem:[%s276] sm:$0x77]
        %v278 = vld [vmem:[%s1] sm:$0xf]
        %v280 = vcombine.high %v277, %v277
        %282 = vrot.lane.b32.xlu0 %v277, 16
        %v283 = vpop.permute.xlu0 %282
        %284 = vrot.lane.b32.xlu0 %v280, 16
        %v285 = vpop.permute.xlu0 %284
        %v286 = vlaneseq
        %v287 = vand.u32 %v286, 127
        %vm288 = vcmp.lt.s32.totalorder %v287, 16
        %v289 = vsel %vm288, %v283, %v285
        %v290 = vsel %vm288, %v285, %v283
        %v291 = vld [vmem:[%s3] sm:$0x3]
        %v293 = vlaneseq
        %v294 = vshrl.u32 %v293, 7
        %v295 = vsub.s32 0, %v294
        %v296 = vrot.slane %v291, %v295
        %v297 = vlaneseq
        %v298 = vshrl.u32 %v297, 7
        %v299 = vsub.s32 1, %v298
        %v300 = vrot.slane %v291, %v299
        %v303 = vmul.f32 %v290, %v296
        %v304 = vmul.f32 %v289, %v300
        %305 = vrot.lane.b32.xlu0 %v277, 112
        %v306 = vpop.permute.xlu0 %305
        %307 = vrot.lane.b32.xlu0 %v280, 112
        %v308 = vpop.permute.xlu0 %307
        %vm309 = vcmp.lt.s32.totalorder %v287, 112
        %v310 = vsel %vm309, %v306, %v308
        %v311 = vsel %vm309, %v308, %v306
        %v312 = vld [vmem:[%s4] sm:$0x3]
        %v314 = vlaneseq
        %v315 = vshrl.u32 %v314, 7
        %v316 = vsub.s32 0, %v315
        %v317 = vrot.slane %v312, %v316
        %v318 = vlaneseq
        %v319 = vshrl.u32 %v318, 7
        %v320 = vsub.s32 1, %v319
        %v321 = vrot.slane %v312, %v320
        %v324 = vmul.f32 %v310, %v317
        %v325 = vmul.f32 %v311, %v321
        %v326 = vrot.slane %v277, 5
        %v327 = vrot.slane %v280, 5
        %v332 = vrot.slane %v324, 2
        %v333 = vrot.slane %v325, 2
        %vm336 = vcmask 1042432
        %v337 = vsel %vm336, %v303, %v326
        %v338 = vsel %vm336, %v304, %v327
        %vm339 = vcmask 1045504
        %v340 = vsel %vm339, %v337, %v332
        %v341 = vsel %vm339, %v338, %v333
        %342 = vrot.lane.b32.xlu0 %v340, 1
        %v343 = vpop.permute.xlu0 %342
        %344 = vrot.lane.b32.xlu0 %v332, 1
        %v345 = vpop.permute.xlu0 %344
        %346 = vrot.lane.b32.xlu0 %v341, 1
        %v347 = vpop.permute.xlu0 %346
        %348 = vrot.lane.b32.xlu0 %v333, 1
        %v349 = vpop.permute.xlu0 %348
        %vm350 = vcmp.lt.s32.totalorder %v287, 1
        %v351 = vsel %vm350, %v343, %v347
        %v352 = vsel %vm350, %v345, %v349
        %v353 = vsel %vm350, %v347, %v343
        %v354 = vsel %vm350, %v349, %v345
        %v355 = vld [vmem:[%s5] sm:$0x3]
        %v357 = vlaneseq
        %v358 = vshrl.u32 %v357, 7
        %v359 = vsub.s32 0, %v358
        %v360 = vrot.slane %v355, %v359
        %v361 = vlaneseq
        %v362 = vshrl.u32 %v361, 7
        %v363 = vsub.s32 1, %v362
        %v364 = vrot.slane %v355, %v363
        %v367 = vmul.f32 %v353, %v360
        %v368 = vmul.f32 %v351, %v364
        %v369 = vmul.f32 %v354, %v360
        %v370 = vmul.f32 %v352, %v364
        %371 = vrot.lane.b32.xlu0 %v340, 127
        %v372 = vpop.permute.xlu0 %371
        %373 = vrot.lane.b32.xlu0 %v332, 127
        %v374 = vpop.permute.xlu0 %373
        %375 = vrot.lane.b32.xlu0 %v341, 127
        %v376 = vpop.permute.xlu0 %375
        %377 = vrot.lane.b32.xlu0 %v333, 127
        %v378 = vpop.permute.xlu0 %377
        %vm379 = vcmp.lt.s32.totalorder %v287, 127
        %v380 = vsel %vm379, %v372, %v376
        %v381 = vsel %vm379, %v374, %v378
        %v382 = vsel %vm379, %v376, %v372
        %v383 = vsel %vm379, %v378, %v374
        %v384 = vld [vmem:[%s6] sm:$0x3]
        %v386 = vlaneseq
        %v387 = vshrl.u32 %v386, 7
        %v388 = vsub.s32 0, %v387
        %v389 = vrot.slane %v384, %v388
        %v390 = vlaneseq
        %v391 = vshrl.u32 %v390, 7
        %v392 = vsub.s32 1, %v391
        %v393 = vrot.slane %v384, %v392
        %v396 = vmul.f32 %v380, %v389
        %v397 = vmul.f32 %v382, %v393
        %v398 = vmul.f32 %v381, %v389
        %v399 = vmul.f32 %v383, %v393
        %401 = vrot.lane.b32.xlu0 %v278, 119
        %v402 = vpop.permute.xlu0 %401
        %vm403 = vcmask 72704
        %v404 = vsel %vm403, %v402, 0
        %vm406 = vcmask 1040384
        %v407 = vsel %vm406, %v332, 0
        %v409 = vsel %vm406, %v333, 0
        %411 = vmatprep.subr.mxu0 0.0
        %412 = vmatpush1.msra.mxu0 0.0
        %413 = vmatprep.subr.mxu0 0.0
        %414 = vmatpush1.msra.mxu0 0.0
        %415 = vmatprep.subr.mxu0 0.0
        %416 = vmatpush1.msra.mxu0 0.0
        %417 = vmatprep.subr.mxu0 0.0
        %418 = vmatpush1.msra.mxu0 0.0
        %419 = vmatprep.subr.mxu0 0.0
        %420 = vmatpush1.msra.mxu0 0.0
        %421 = vmatprep.subr.mxu0 0.0
        %422 = vmatpush1.msra.mxu0 0.0
        %423 = vmatprep.subr.mxu0 0.0
        %424 = vmatpush1.msra.mxu0 0.0
        %425 = vmatprep.subr.mxu0 0.0
        %426 = vmatpush1.msra.mxu0 0.0
        %427 = vmatprep.subr.mxu0 0.0
        %428 = vmatpush1.msra.mxu0 0.0
        %429 = vmatprep.subr.mxu0 0.0
        %430 = vmatpush1.msra.mxu0 0.0
        %431 = vmatprep.subr.mxu0 0.0
        %432 = vmatpush1.msra.mxu0 0.0
        %433 = vmatprep.subr.mxu0 0.0
        %434 = vmatpush1.msra.mxu0 0.0
        %435 = vmatprep.subr.mxu0 0.0
        %436 = vmatpush1.msra.mxu0 0.0
        %437 = vmatprep.subr.mxu0 0.0
        %438 = vmatpush1.msra.mxu0 0.0
        %439 = vmatprep.subr.mxu0 %v409
        %440 = vmatpush1.msra.mxu0 %v407
        %441 = vmatprep.subr.mxu0 %v341
        %442 = vmatpush1.msra.mxu0 %v340
        %443 = vmatprep.subr.mxu0 0.0
        %444 = vmatpush2.msra.mxu0 0.0
        %445 = vmatprep.subr.mxu0 0.0
        %446 = vmatpush2.msra.mxu0 0.0
        %447 = vmatprep.subr.mxu0 0.0
        %448 = vmatpush2.msra.mxu0 0.0
        %449 = vmatprep.subr.mxu0 0.0
        %450 = vmatpush2.msra.mxu0 0.0
        %451 = vmatprep.subr.mxu0 0.0
        %452 = vmatpush2.msra.mxu0 0.0
        %453 = vmatprep.subr.mxu0 0.0
        %454 = vmatpush2.msra.mxu0 0.0
        %455 = vmatprep.subr.mxu0 0.0
        %456 = vmatpush2.msra.mxu0 0.0
        %457 = vmatprep.subr.mxu0 0.0
        %458 = vmatpush2.msra.mxu0 0.0
        %459 = vmatprep.subr.mxu0 0.0
        %460 = vmatpush2.msra.mxu0 0.0
        %461 = vmatprep.subr.mxu0 0.0
        %462 = vmatpush2.msra.mxu0 0.0
        %463 = vmatprep.subr.mxu0 0.0
        %464 = vmatpush2.msra.mxu0 0.0
        %465 = vmatprep.subr.mxu0 0.0
        %466 = vmatpush2.msra.mxu0 0.0
        %467 = vmatprep.subr.mxu0 0.0
        %468 = vmatpush2.msra.mxu0 0.0
        %469 = vmatprep.subr.mxu0 0.0
        %470 = vmatpush2.msra.mxu0 0.0
        %471 = vmatprep.subr.mxu0 0.0
        %472 = vmatpush2.msra.mxu0 0.0
        %473 = vmatprep.subr.mxu0 0.0
        %474 = vmatpush2.msra.mxu0 0.0
        %475 = vmatprep.mubr.f32.mxu0 0.0
        %476 = vmatmul.mubr.f32.gmra.mxu0 %v404
        %v477 = vpop.f32.mrf.mxu0
        %v478 = vadd.f32 0.0, %v477
        %v479 = vpop.f32.mrf.mxu0
        %v480 = vadd.f32 0.0, %v479
        %481 = vdwg.mxu0
        %v482 = vsel %vm403, %v278, 0
        %v485 = vsel %vm406, %v369, 0
        %v488 = vsel %vm406, %v370, 0
        %490 = vmatprep.subr.mxu0 0.0
        %491 = vmatpush1.msra.mxu0 0.0
        %492 = vmatprep.subr.mxu0 0.0
        %493 = vmatpush1.msra.mxu0 0.0
        %494 = vmatprep.subr.mxu0 0.0
        %495 = vmatpush1.msra.mxu0 0.0
        %496 = vmatprep.subr.mxu0 0.0
        %497 = vmatpush1.msra.mxu0 0.0
        %498 = vmatprep.subr.mxu0 0.0
        %499 = vmatpush1.msra.mxu0 0.0
        %500 = vmatprep.subr.mxu0 0.0
        %501 = vmatpush1.msra.mxu0 0.0
        %502 = vmatprep.subr.mxu0 0.0
        %503 = vmatpush1.msra.mxu0 0.0
        %504 = vmatprep.subr.mxu0 0.0
        %505 = vmatpush1.msra.mxu0 0.0
        %506 = vmatprep.subr.mxu0 0.0
        %507 = vmatpush1.msra.mxu0 0.0
        %508 = vmatprep.subr.mxu0 0.0
        %509 = vmatpush1.msra.mxu0 0.0
        %510 = vmatprep.subr.mxu0 0.0
        %511 = vmatpush1.msra.mxu0 0.0
        %512 = vmatprep.subr.mxu0 0.0
        %513 = vmatpush1.msra.mxu0 0.0
        %514 = vmatprep.subr.mxu0 0.0
        %515 = vmatpush1.msra.mxu0 0.0
        %516 = vmatprep.subr.mxu0 0.0
        %517 = vmatpush1.msra.mxu0 0.0
        %518 = vmatprep.subr.mxu0 %v488
        %519 = vmatpush1.msra.mxu0 %v485
        %520 = vmatprep.subr.mxu0 %v368
        %521 = vmatpush1.msra.mxu0 %v367
        %522 = vmatprep.subr.mxu0 0.0
        %523 = vmatpush2.msra.mxu0 0.0
        %524 = vmatprep.subr.mxu0 0.0
        %525 = vmatpush2.msra.mxu0 0.0
        %526 = vmatprep.subr.mxu0 0.0
        %527 = vmatpush2.msra.mxu0 0.0
        %528 = vmatprep.subr.mxu0 0.0
        %529 = vmatpush2.msra.mxu0 0.0
        %530 = vmatprep.subr.mxu0 0.0
        %531 = vmatpush2.msra.mxu0 0.0
        %532 = vmatprep.subr.mxu0 0.0
        %533 = vmatpush2.msra.mxu0 0.0
        %534 = vmatprep.subr.mxu0 0.0
        %535 = vmatpush2.msra.mxu0 0.0
        %536 = vmatprep.subr.mxu0 0.0
        %537 = vmatpush2.msra.mxu0 0.0
        %538 = vmatprep.subr.mxu0 0.0
        %539 = vmatpush2.msra.mxu0 0.0
        %540 = vmatprep.subr.mxu0 0.0
        %541 = vmatpush2.msra.mxu0 0.0
        %542 = vmatprep.subr.mxu0 0.0
        %543 = vmatpush2.msra.mxu0 0.0
        %544 = vmatprep.subr.mxu0 0.0
        %545 = vmatpush2.msra.mxu0 0.0
        %546 = vmatprep.subr.mxu0 0.0
        %547 = vmatpush2.msra.mxu0 0.0
        %548 = vmatprep.subr.mxu0 0.0
        %549 = vmatpush2.msra.mxu0 0.0
        %550 = vmatprep.subr.mxu0 0.0
        %551 = vmatpush2.msra.mxu0 0.0
        %552 = vmatprep.subr.mxu0 0.0
        %553 = vmatpush2.msra.mxu0 0.0
        %554 = vmatprep.mubr.f32.mxu0 0.0
        %555 = vmatmul.mubr.f32.gmra.mxu0 %v482
        %v556 = vpop.f32.mrf.mxu0
        %v557 = vadd.f32 %v478, %v556
        %v558 = vpop.f32.mrf.mxu0
        %v559 = vadd.f32 %v480, %v558
        %560 = vdwg.mxu0
        %561 = vrot.lane.b32.xlu0 %v278, 110
        %v562 = vpop.permute.xlu0 %561
        %v563 = vsel %vm403, %v562, 0
        %v566 = vsel %vm406, %v398, 0
        %v569 = vsel %vm406, %v399, 0
        %571 = vmatprep.subr.mxu0 0.0
        %572 = vmatpush1.msra.mxu0 0.0
        %573 = vmatprep.subr.mxu0 0.0
        %574 = vmatpush1.msra.mxu0 0.0
        %575 = vmatprep.subr.mxu0 0.0
        %576 = vmatpush1.msra.mxu0 0.0
        %577 = vmatprep.subr.mxu0 0.0
        %578 = vmatpush1.msra.mxu0 0.0
        %579 = vmatprep.subr.mxu0 0.0
        %580 = vmatpush1.msra.mxu0 0.0
        %581 = vmatprep.subr.mxu0 0.0
        %582 = vmatpush1.msra.mxu0 0.0
        %583 = vmatprep.subr.mxu0 0.0
        %584 = vmatpush1.msra.mxu0 0.0
        %585 = vmatprep.subr.mxu0 0.0
        %586 = vmatpush1.msra.mxu0 0.0
        %587 = vmatprep.subr.mxu0 0.0
        %588 = vmatpush1.msra.mxu0 0.0
        %589 = vmatprep.subr.mxu0 0.0
        %590 = vmatpush1.msra.mxu0 0.0
        %591 = vmatprep.subr.mxu0 0.0
        %592 = vmatpush1.msra.mxu0 0.0
        %593 = vmatprep.subr.mxu0 0.0
        %594 = vmatpush1.msra.mxu0 0.0
        %595 = vmatprep.subr.mxu0 0.0
        %596 = vmatpush1.msra.mxu0 0.0
        %597 = vmatprep.subr.mxu0 0.0
        %598 = vmatpush1.msra.mxu0 0.0
        %599 = vmatprep.subr.mxu0 %v569
        %600 = vmatpush1.msra.mxu0 %v566
        %601 = vmatprep.subr.mxu0 %v397
        %602 = vmatpush1.msra.mxu0 %v396
        %603 = vmatprep.subr.mxu0 0.0
        %604 = vmatpush2.msra.mxu0 0.0
        %605 = vmatprep.subr.mxu0 0.0
        %606 = vmatpush2.msra.mxu0 0.0
        %607 = vmatprep.subr.mxu0 0.0
        %608 = vmatpush2.msra.mxu0 0.0
        %609 = vmatprep.subr.mxu0 0.0
        %610 = vmatpush2.msra.mxu0 0.0
        %611 = vmatprep.subr.mxu0 0.0
        %612 = vmatpush2.msra.mxu0 0.0
        %613 = vmatprep.subr.mxu0 0.0
        %614 = vmatpush2.msra.mxu0 0.0
        %615 = vmatprep.subr.mxu0 0.0
        %616 = vmatpush2.msra.mxu0 0.0
        %617 = vmatprep.subr.mxu0 0.0
        %618 = vmatpush2.msra.mxu0 0.0
        %619 = vmatprep.subr.mxu0 0.0
        %620 = vmatpush2.msra.mxu0 0.0
        %621 = vmatprep.subr.mxu0 0.0
        %622 = vmatpush2.msra.mxu0 0.0
        %623 = vmatprep.subr.mxu0 0.0
        %624 = vmatpush2.msra.mxu0 0.0
        %625 = vmatprep.subr.mxu0 0.0
        %626 = vmatpush2.msra.mxu0 0.0
        %627 = vmatprep.subr.mxu0 0.0
        %628 = vmatpush2.msra.mxu0 0.0
        %629 = vmatprep.subr.mxu0 0.0
        %630 = vmatpush2.msra.mxu0 0.0
        %631 = vmatprep.subr.mxu0 0.0
        %632 = vmatpush2.msra.mxu0 0.0
        %633 = vmatprep.subr.mxu0 0.0
        %634 = vmatpush2.msra.mxu0 0.0
        %635 = vmatprep.mubr.f32.mxu0 0.0
        %636 = vmatmul.mubr.f32.gmra.mxu0 %v563
        %v637 = vpop.f32.mrf.mxu0
        %v638 = vadd.f32 0.0, %v637
        %v639 = vpop.f32.mrf.mxu0
        %v640 = vadd.f32 0.0, %v639
        %641 = vdwg.mxu0
        %v642 = vadd.f32 %v557, %v638
        %v643 = vadd.f32 %v559, %v640
        %v644 = vld [vmem:[%s2] sm:$0xf]
        %646 = vset.pattern.permute.xlu0 0
        %647 = vperm.xlu0 %646, %v644
        %v648 = vpop.permute.xlu0 %647
        %v650 = vadd.f32 %v642, %v648
        %v651 = vadd.f32 %v643, %v648
        %vm652 = vcmask 1043456
        %v653 = vsel %vm652, %v650, -inf
        %v654 = vrot.slane %v653, 4
        %v655 = vmax.f32 %v653, %v654
        %v656 = vrot.slane %v655, 2
        %v657 = vmax.f32 %v655, %v656
        %v658 = vrot.slane %v657, 1
        %v659 = vmax.f32 %v657, %v658
        %v660 = vsel %vm652, %v651, -inf
        %v661 = vrot.slane %v660, 4
        %v662 = vmax.f32 %v660, %v661
        %v663 = vrot.slane %v662, 2
        %v664 = vmax.f32 %v662, %v663
        %v665 = vrot.slane %v664, 1
        %v666 = vmax.f32 %v664, %v665
        %v667 = vsub.f32 %v650, %v659
        %v668 = vsub.f32 %v651, %v666
        %v669 = vmul.f32 %v667, 1.442695
        %v670 = vpow.pop %v669
        %v671 = vmul.f32 %v668, 1.442695
        %v672 = vpow.pop %v671
        %v673 = vsel %vm652, %v670, 0.0
        %v674 = vrot.slane %v673, 4
        %v675 = vadd.f32 %v673, %v674
        %v676 = vrot.slane %v675, 2
        %v677 = vadd.f32 %v675, %v676
        %v678 = vrot.slane %v677, 1
        %v679 = vadd.f32 %v677, %v678
        %v680 = vsel %vm652, %v672, 0.0
        %v681 = vrot.slane %v680, 4
        %v682 = vadd.f32 %v680, %v681
        %v683 = vrot.slane %v682, 2
        %v684 = vadd.f32 %v682, %v683
        %v685 = vrot.slane %v684, 1
        %v686 = vadd.f32 %v684, %v685
        %v687 = vrcp.pop %v679
        %v688 = vmul.f32 1.0, %v687
        %v689 = vrcp.pop %v686
        %v690 = vmul.f32 1.0, %v689
        %v691 = vmul.f32 %v670, %v688
        %v692 = vmul.f32 %v672, %v690
        %v695 = vcombine.low %v691, %v692
        %697 = vst [vmem:[%s271] sm:$0xff] %v695
        %s698 = sand.u32 %s181, 1
        %s699 = scalar_lea.sflag [#allocation3], %s698
        %s700 = sand.u32 %s181, 1
        %s701 = smul.addr %s700, 8
        %s702 = scalar_lea.vmem [#allocation2], %s701
        // Predicated region
        $region49: #{tpu_custom_call.1} parent=47 // pred_check
          %p703 = pneg %p191
        $region50: #{tpu_custom_call.1} parent=47 // pred_check_branch
          %705 = sbr.rel (%p703) target = $region52
        $region51: #{tpu_custom_call.1} parent=47 // pred_region
          %s707 = ssub.s32 128, 128
          %708 = vsyncadd %s699, %s707
          %s709 = smul.addr %s21, 2
          %s710 = smul.addr %s709, 64
          %s711 = scalar_lea.hbm %s7, %s710
          %s713 = sshll.u32 %s702, 4
          %s714 = int_to_ptr.vmem [resolvable:$true] %s713
          %716 = dma.vmem_to_hbm [thread:$0]  %s714, 128, %s711, %s699
        $region52: #{tpu_custom_call.1} parent=47 // pred_fallthru
          _
      $region48: #{tpu_custom_call.1} parent=5 // pred_fallthru
        _
      %p717 = scmp.le.s32.totalorder 2, %s16
      // Predicated region
      $region53: #{tpu_custom_call.1} parent=5 // pred_check
        %p718 = pneg %p717
      $region54: #{tpu_custom_call.1} parent=5 // pred_check_branch
        %720 = sbr.rel (%p718) target = $region56
      $region55: #{tpu_custom_call.1} parent=5 // pred_region
        %s721 = ssub.s32 %s16, 2
        // Predicated region
        $region57: #{tpu_custom_call.1} parent=55 // pred_check
          %p722 = pneg %p197
        $region58: #{tpu_custom_call.1} parent=55 // pred_check_branch
          %724 = sbr.rel (%p722) target = $region60
        $region59: #{tpu_custom_call.1} parent=55 // pred_region
          %s725 = sand.u32 %s182, 1
          %s726 = scalar_lea.sflag [#allocation3], %s725
          %s727 = sand.u32 %s182, 1
          %s728 = smul.addr %s727, 8
          %s729 = scalar_lea.vmem [#allocation2], %s728
          %730 = dma.done %s726, 128
        $region60: #{tpu_custom_call.1} parent=55 // pred_fallthru
          _
      $region56: #{tpu_custom_call.1} parent=5 // pred_fallthru
        _
    $region6: #{tpu_custom_call.1} parent=1 // loop_footer
      %s20 = sadd.s32 1, %s16
    $region7: #{tpu_custom_call.1} parent=1 // loop_footer_branch
      %15 = sbr.rel target = $region3
    $region8: #{tpu_custom_call.1} parent=1 // loop_exit
      _
    %731 = vsyncpa [#allocation3], 1
    %s732 = scalar_lea.sflag [#allocation3], 1
    %733 = vsyncpa %s732, 1

</llo_original>
